<compile_context>
chip_gen: v7x
topology: tpu7x:2x2x1
jax: 0.10.0
libtpu: 0.0.40
codegen_flags: <defaults>
</compile_context>

<pallas_src>
import functools
import math

import jax
import jax.numpy as jnp
from jax.experimental import pallas as pl
from jax.experimental.pallas import tpu as pltpu

_NEG_BIG = -1e30  # lane-padding fill; exp underflows to exactly 0 after max-subtraction


def _logit_gambler_kernel(logits_ref, u_ref, out_ref, *, inv_temperature):
    # Gumbel(0, 1) noise from strictly-(0,1) uniforms, added to the logits.
    gumbel = -jnp.log(-jnp.log(u_ref[...]))
    g = (logits_ref[...] + gumbel) * inv_temperature

    # Numerically stable softmax along the last (lane) axis.
    m = jnp.max(g, axis=-1, keepdims=True)
    e = jnp.exp(g - m)
    s = jnp.sum(e, axis=-1, keepdims=True)
    # One divide per row (on the (tb,1) column), then a broadcast VALU multiply.
    out_ref[...] = e * (1.0 / s)


def logit_gambler_forward(logits, noise_key, *, temperature=1.0, block_rows=1024):
    """Pallas implementation of LogitGambler.forward().

    `logits` has shape == output_shape; softmax is over the last axis.
    `noise_key` is a jax.random key used for the Gumbel noise draw.
    """
    orig_shape = logits.shape
    n = orig_shape[-1]
    flat = logits.reshape(-1, n).astype(jnp.float32)
    rows = flat.shape[0]

    # --- lane-dense layout: pad the softmax axis to a multiple of 128 -------
    n_pad = pl.cdiv(n, 128) * 128
    if n_pad != n:
        flat = jnp.pad(flat, ((0, 0), (0, n_pad - n)), constant_values=_NEG_BIG)

    # --- row tiling: as large as safely fits pipelined VMEM -----------------
    # 3 arrays (logits, u, out) x 2 pipeline buffers x tb x n_pad x 4 bytes,
    # capped at ~8 MiB total so v5e's 16 MiB scoped-VMEM default has headroom.
    bytes_per_row = 3 * 2 * n_pad * 4
    max_tb = max(8, ((8 << 20) // bytes_per_row) // 8 * 8)
    tb = min(block_rows, max_tb, rows)
    rows_pad = pl.cdiv(rows, tb) * tb
    if rows_pad != rows:
        flat = jnp.pad(flat, ((0, rows_pad - rows), (0, 0)))

    # --- uniform (0,1) noise, grid-invariant (independent of tile choice) ---
    # ((bits >> 8) + 0.5) / 2^24 is strictly inside (0, 1): the Gumbel
    # transform never sees log(0) or log(1).
    bits = jax.random.bits(noise_key, (rows_pad, n_pad), jnp.uint32)
    u = ((bits >> 8).astype(jnp.float32) + 0.5) * (1.0 / float(1 << 24))

    kernel = functools.partial(
        _logit_gambler_kernel, inv_temperature=1.0 / float(temperature)
    )

    out = pl.pallas_call(
        kernel,
        out_shape=jax.ShapeDtypeStruct((rows_pad, n_pad), jnp.float32),
        grid_spec=pltpu.PrefetchScalarGridSpec(
            num_scalar_prefetch=0,
            grid=(rows_pad // tb,),
            in_specs=[
                pl.BlockSpec((tb, n_pad), lambda i: (i, 0)),
                pl.BlockSpec((tb, n_pad), lambda i: (i, 0)),
            ],
            out_specs=pl.BlockSpec((tb, n_pad), lambda i: (i, 0)),
        ),
        compiler_params=pltpu.CompilerParams(
            dimension_semantics=("parallel",),  # independent rows -> megacore on v7x
        ),
    )(flat, u)

    return out[:rows, :n].reshape(orig_shape)


if __name__ == "__main__":
    output_shape = (2, 16, 128)
    temperature = 1.0

    root = jax.random.PRNGKey(0)
    init_key, noise_key = jax.random.split(root)

    # Parameter init mirroring torch.nn.init.uniform_(logits, log(0.01), log(1.0)).
    logits = jax.random.uniform(
        init_key, output_shape, jnp.float32,
        minval=math.log(0.01), maxval=math.log(1.0),
    )

    y = logit_gambler_forward(logits, noise_key, temperature=temperature)
    y = jax.block_until_ready(y)

    # Sanity: shape preserved, softmax rows sum to 1, values strictly in (0, 1).
    assert y.shape == output_shape
    assert bool(jnp.allclose(jnp.sum(y, axis=-1), 1.0, atol=1e-4))
    assert bool(jnp.all(y > 0.0)) and bool(jnp.all(y < 1.0))

    # Exercise the padding path (last dim not a multiple of 128, odd row count).
    shape2 = (3, 5, 100)
    k1, k2 = jax.random.split(noise_key)
    logits2 = jax.random.uniform(
        k1, shape2, jnp.float32, minval=math.log(0.01), maxval=math.log(1.0)
    )
    y2 = jax.block_until_ready(logit_gambler_forward(logits2, k2, temperature=0.5))
    assert y2.shape == shape2
    assert bool(jnp.allclose(jnp.sum(y2, axis=-1), 1.0, atol=1e-4))

    print("KERNEL_OK")
</pallas_src>

<mosaic_0001>
module attributes {stable_mosaic.version = 11 : i64} {
  func.func @_logit_gambler_kernel(%arg0: i32, %arg1: memref<32x128xf32, #tpu.memory_space<vmem>>, %arg2: memref<32x128xf32, #tpu.memory_space<vmem>>, %arg3: memref<32x128xf32, #tpu.memory_space<vmem>>) attributes {dimension_semantics = [#tpu.dimension_semantics<parallel>], iteration_bounds = array<i64: 1>, scalar_prefetch = 0 : i64, scratch_operands = 0 : i64, tpu.core_type = #tpu.core_type<tc>, window_params = [{transform_indices = @transform_0, window_bounds = array<i64: 32, 128>}, {transform_indices = @transform_1, window_bounds = array<i64: 32, 128>}, {transform_indices = @transform_2, window_bounds = array<i64: 32, 128>}]} {
    %c0 = arith.constant 0 : index
    %c0_0 = arith.constant 0 : index
    %0 = vector.load %arg2[%c0, %c0_0] : memref<32x128xf32, #tpu.memory_space<vmem>>, vector<32x128xf32>
    %1 = math.log %0 : vector<32x128xf32>
    %cst = arith.constant 0.000000e+00 : f32
    %2 = vector.broadcast %cst : f32 to vector<32x128xf32>
    %3 = arith.subf %2, %1 : vector<32x128xf32>
    %4 = math.log %3 : vector<32x128xf32>
    %cst_1 = arith.constant 0.000000e+00 : f32
    %5 = vector.broadcast %cst_1 : f32 to vector<32x128xf32>
    %6 = arith.subf %5, %4 : vector<32x128xf32>
    %c0_2 = arith.constant 0 : index
    %c0_3 = arith.constant 0 : index
    %7 = vector.load %arg1[%c0_2, %c0_3] : memref<32x128xf32, #tpu.memory_space<vmem>>, vector<32x128xf32>
    %8 = arith.addf %7, %6 : vector<32x128xf32>
    %cst_4 = arith.constant 1.000000e+00 : f32
    %9 = vector.broadcast %cst_4 : f32 to vector<32x128xf32>
    %10 = arith.mulf %8, %9 : vector<32x128xf32>
    %cst_5 = arith.constant dense<0xFF800000> : vector<32xf32>
    %11 = vector.multi_reduction <maximumf>, %10, %cst_5 [1] : vector<32x128xf32> to vector<32xf32>
    %12 = vector.shape_cast %11 : vector<32xf32> to vector<32x1xf32>
    %13 = vector.broadcast %12 : vector<32x1xf32> to vector<32x128xf32>
    %14 = arith.subf %10, %13 : vector<32x128xf32>
    %15 = math.exp %14 : vector<32x128xf32>
    %cst_6 = arith.constant dense<0.000000e+00> : vector<32xf32>
    %16 = vector.multi_reduction <add>, %15, %cst_6 [1] : vector<32x128xf32> to vector<32xf32>
    %17 = vector.shape_cast %16 : vector<32xf32> to vector<32x1xf32>
    %cst_7 = arith.constant 1.000000e+00 : f32
    %18 = vector.broadcast %cst_7 : f32 to vector<32x1xf32>
    %19 = arith.divf %18, %17 : vector<32x1xf32>
    %20 = vector.broadcast %19 : vector<32x1xf32> to vector<32x128xf32>
    %21 = arith.mulf %15, %20 : vector<32x128xf32>
    %c0_8 = arith.constant 0 : index
    %c0_9 = arith.constant 0 : index
    %22 = vector.load %arg3[%c0_8, %c0_9] : memref<32x128xf32, #tpu.memory_space<vmem>>, vector<32x128xf32>
    tpu.vector_store %arg3[%c0_8, %c0_9], %21 {strides = array<i32>} : memref<32x128xf32, #tpu.memory_space<vmem>>, vector<32x128xf32>,
    return
  }
  func.func @transform_0(%arg0: i32) -> (i32, i32) {
    %c0_i32 = arith.constant 0 : i32
    %c0_i32_0 = arith.constant 0 : i32
    return %arg0, %c0_i32 : i32, i32
  }
  func.func @transform_1(%arg0: i32) -> (i32, i32) {
    %c0_i32 = arith.constant 0 : i32
    %c0_i32_0 = arith.constant 0 : i32
    return %arg0, %c0_i32 : i32, i32
  }
  func.func @transform_2(%arg0: i32) -> (i32, i32) {
    %c0_i32 = arith.constant 0 : i32
    %c0_i32_0 = arith.constant 0 : i32
    return %arg0, %c0_i32 : i32, i32
  }
}

</mosaic_0001>

<llo_original>
// kernel: tpu_custom_call.1
$region0: #{tpu_custom_call.1}
  #allocation0 [shape = 'u32[]', space=smem, size = 0x4, offset = 0x4, fixed_abs, tag = 'smem constant byte address 0x4 - core index']
  #allocation1 [shape = 'u32[144,128]{1,0:T(1,128)}', space=vmem, size = 0x12000, scoped, tag = 'internal scratch']
  %s0 = inlined_call_operand.hbm [shape: f32[32,128], index: 0, kind: input, shape index: {}]
  %s1 = inlined_call_operand.hbm [shape: f32[32,128], index: 1, kind: input, shape index: {}]
  %s2 = inlined_call_operand.hbm [shape: f32[32,128], index: 2, kind: output, shape index: {}]
  %s3 = sld [smem:[#allocation0]]
  $region26: #{tpu_custom_call.1} parent=0
    _
  %s5 = ssub.s32 1, %s3
  %s6 = scalar_select 0, %s5, %s3
  $region1: #{tpu_custom_call.1} parent=0
    #allocation2 [shape = 'u8[16384]{0}', space=vmem, size = 0x4000, scoped, tag = 'input window, operand 0, single buffered']
    #allocation3 [shape = 's32[1]{0}', space=sflag, size = 0x4, scoped, tag = 'scoped memory for tpu_custom_call.1']
    #allocation4 [shape = 's32[1]{0}', space=sflag, size = 0x4, scoped, tag = 'scoped memory for tpu_custom_call.1']
    #allocation5 [shape = 'u8[16384]{0}', space=vmem, size = 0x4000, scoped, tag = 'input window, operand 1, single buffered']
    #allocation6 [shape = 's32[1]{0}', space=sflag, size = 0x4, scoped, tag = 'scoped memory for tpu_custom_call.1']
    #allocation7 [shape = 'u8[16384]{0}', space=vmem, size = 0x4000, scoped, tag = 'output window, operand 0, single buffered']
    %7 = vsyncpa [#allocation3], 0
    %8 = vsyncpa [#allocation6], 0
    %9 = vsyncpa [#allocation4], 0
    // Predicated region
    $region2: #{tpu_custom_call.1} parent=1 // pred_check
      _
    $region3: #{tpu_custom_call.1} parent=1 // pred_check_branch
      %11 = sbr.rel (0) target = $region5
    $region4: #{tpu_custom_call.1} parent=1 // pred_region
      %s13 = ssub.s32 512, 512
      %14 = vsyncadd [#allocation3], %s13
      %s15 = sshll.u32 [#allocation2], 4
      %s16 = int_to_ptr.vmem [resolvable:$true] %s15
      %21 = dma.hbm_to_vmem [thread:$0]  %s0, 512, %s16, [#allocation3], 128, 128, 8
    $region5: #{tpu_custom_call.1} parent=1 // pred_fallthru
      _
    // Predicated region
    $region6: #{tpu_custom_call.1} parent=1 // pred_check
      _
    $region7: #{tpu_custom_call.1} parent=1 // pred_check_branch
      %23 = sbr.rel (0) target = $region9
    $region8: #{tpu_custom_call.1} parent=1 // pred_region
      %s25 = ssub.s32 512, 512
      %26 = vsyncadd [#allocation6], %s25
      %s27 = sshll.u32 [#allocation5], 4
      %s28 = int_to_ptr.vmem [resolvable:$true] %s27
      %33 = dma.hbm_to_vmem [thread:$0]  %s1, 512, %s28, [#allocation6], 128, 128, 8
    $region9: #{tpu_custom_call.1} parent=1 // pred_fallthru
      _
    // Predicated region
    $region10: #{tpu_custom_call.1} parent=1 // pred_check
      _
    $region11: #{tpu_custom_call.1} parent=1 // pred_check_branch
      %35 = sbr.rel (0) target = $region13
    $region12: #{tpu_custom_call.1} parent=1 // pred_region
      %36 = dma.done [#allocation3], 512
    $region13: #{tpu_custom_call.1} parent=1 // pred_fallthru
      _
    // Predicated region
    $region14: #{tpu_custom_call.1} parent=1 // pred_check
      _
    $region15: #{tpu_custom_call.1} parent=1 // pred_check_branch
      %38 = sbr.rel (0) target = $region17
    $region16: #{tpu_custom_call.1} parent=1 // pred_region
      %39 = dma.done [#allocation6], 512
    $region17: #{tpu_custom_call.1} parent=1 // pred_fallthru
      _
    %v40 = vld [vmem:[#allocation5] sm:$0xff]
    %v41 = vld [vmem:[#allocation5 + $0x8] sm:$0xff]
    %v42 = vld [vmem:[#allocation5 + $0x10] sm:$0xff]
    %v43 = vld [vmem:[#allocation5 + $0x18] sm:$0xff]
    %v44 = vlog2.pop %v40
    %v45 = vmul.f32 %v44, 0.6931472
    %v46 = vlog2.pop %v41
    %v47 = vmul.f32 %v46, 0.6931472
    %v48 = vlog2.pop %v42
    %v49 = vmul.f32 %v48, 0.6931472
    %v50 = vlog2.pop %v43
    %v51 = vmul.f32 %v50, 0.6931472
    %v52 = vsub.f32 0.0, %v45
    %v53 = vsub.f32 0.0, %v47
    %v54 = vsub.f32 0.0, %v49
    %v55 = vsub.f32 0.0, %v51
    %v56 = vlog2.pop %v52
    %v57 = vmul.f32 %v56, 0.6931472
    %v58 = vlog2.pop %v53
    %v59 = vmul.f32 %v58, 0.6931472
    %v60 = vlog2.pop %v54
    %v61 = vmul.f32 %v60, 0.6931472
    %v62 = vlog2.pop %v55
    %v63 = vmul.f32 %v62, 0.6931472
    %v64 = vsub.f32 0.0, %v57
    %v65 = vsub.f32 0.0, %v59
    %v66 = vsub.f32 0.0, %v61
    %v67 = vsub.f32 0.0, %v63
    %v68 = vld [vmem:[#allocation2] sm:$0xff]
    %v69 = vld [vmem:[#allocation2 + $0x8] sm:$0xff]
    %v70 = vld [vmem:[#allocation2 + $0x10] sm:$0xff]
    %v71 = vld [vmem:[#allocation2 + $0x18] sm:$0xff]
    %v72 = vadd.f32 %v68, %v64
    %v73 = vadd.f32 %v69, %v65
    %v74 = vadd.f32 %v70, %v66
    %v75 = vadd.f32 %v71, %v67
    %76 = vmax.xlane.f32.xlu0 %v72
    %v77 = vpop.xlane.xlu0 %76
    %78 = vmax.xlane.f32.xlu0 %v73
    %v79 = vpop.xlane.xlu0 %78
    %80 = vmax.xlane.f32.xlu0 %v74
    %v81 = vpop.xlane.xlu0 %80
    %82 = vmax.xlane.f32.xlu0 %v75
    %v83 = vpop.xlane.xlu0 %82
    %v84 = vsub.f32 %v72, %v77
    %v85 = vsub.f32 %v73, %v79
    %v86 = vsub.f32 %v74, %v81
    %v87 = vsub.f32 %v75, %v83
    %v88 = vmul.f32 %v84, 1.442695
    %v89 = vpow.pop %v88
    %v90 = vmul.f32 %v85, 1.442695
    %v91 = vpow.pop %v90
    %v92 = vmul.f32 %v86, 1.442695
    %v93 = vpow.pop %v92
    %v94 = vmul.f32 %v87, 1.442695
    %v95 = vpow.pop %v94
    %96 = vadd.xlane.f32.xlu0 %v89
    %v97 = vpop.xlane.xlu0 %96
    %98 = vadd.xlane.f32.xlu0 %v91
    %v99 = vpop.xlane.xlu0 %98
    %100 = vadd.xlane.f32.xlu0 %v93
    %v101 = vpop.xlane.xlu0 %100
    %102 = vadd.xlane.f32.xlu0 %v95
    %v103 = vpop.xlane.xlu0 %102
    %v104 = vrcp.pop %v97
    %v105 = vmul.f32 1.0, %v104
    %v106 = vrcp.pop %v99
    %v107 = vmul.f32 1.0, %v106
    %v108 = vrcp.pop %v101
    %v109 = vmul.f32 1.0, %v108
    %v110 = vrcp.pop %v103
    %v111 = vmul.f32 1.0, %v110
    %v112 = vmul.f32 %v89, %v105
    %v113 = vmul.f32 %v91, %v107
    %v114 = vmul.f32 %v93, %v109
    %v115 = vmul.f32 %v95, %v111
    %116 = vst [vmem:[#allocation7] sm:$0xff] %v112
    %117 = vst [vmem:[#allocation7 + $0x8] sm:$0xff] %v113
    %118 = vst [vmem:[#allocation7 + $0x10] sm:$0xff] %v114
    %119 = vst [vmem:[#allocation7 + $0x18] sm:$0xff] %v115
    // Predicated region
    $region18: #{tpu_custom_call.1} parent=1 // pred_check
      _
    $region19: #{tpu_custom_call.1} parent=1 // pred_check_branch
      %121 = sbr.rel (0) target = $region21
    $region20: #{tpu_custom_call.1} parent=1 // pred_region
      %s123 = ssub.s32 512, 512
      %124 = vsyncadd [#allocation4], %s123
      %s125 = sshll.u32 [#allocation7], 4
      %s126 = int_to_ptr.vmem [resolvable:$true] %s125
      %131 = dma.vmem_to_hbm [thread:$0]  %s126, 512, %s2, [#allocation4], 128, 128, 8
    $region21: #{tpu_custom_call.1} parent=1 // pred_fallthru
      _
    // Predicated region
    $region22: #{tpu_custom_call.1} parent=1 // pred_check
      _
    $region23: #{tpu_custom_call.1} parent=1 // pred_check_branch
      %133 = sbr.rel (0) target = $region25
    $region24: #{tpu_custom_call.1} parent=1 // pred_region
      %134 = dma.done [#allocation4], 512
    $region25: #{tpu_custom_call.1} parent=1 // pred_fallthru
      _
    %135 = vsyncpa [#allocation3], 1
    %136 = vsyncpa [#allocation6], 1
    %137 = vsyncpa [#allocation4], 1

</llo_original>
